<compile_context>
chip_gen: v7x
topology: tpu7x:2x2x1
jax: 0.10.0
libtpu: 0.0.40
codegen_flags: <defaults>
</compile_context>

<pallas_src>
import jax
import jax.numpy as jnp
from jax.experimental import pallas as pl
from jax.experimental.pallas import tpu as pltpu

_LANES = 1024            # lane-dense last dim (multiple of 128)
_MAX_BLOCK_ROWS = 2048   # (2048, 1024) f32 tile = 8 MiB
_SMALL_TOTAL = 64 * 1024  # below this, plain JAX beats a kernel launch


def _linreg_kernel(w_ref, b_ref, x_ref, o_ref):
    # w_ref, b_ref: (1, 1) f32 scalars in SMEM; x_ref/o_ref: (block_rows, _LANES) VMEM tiles.
    w = w_ref[0, 0]
    b = b_ref[0, 0]
    o_ref[...] = (x_ref[...] * w + b).astype(o_ref.dtype)


def _vmem_capacity_bytes() -> int:
    try:
        return int(pltpu.get_tpu_info().vmem_capacity_bytes)
    except Exception:
        return 64 * 1024 * 1024  # conservative default (v7x per-TC VMEM)


def _pick_block_rows(rows: int, in_itemsize: int, out_itemsize: int,
                     max_block_rows=None):
    """Pick a row-tile size and an explicit VMEM limit for the pipeline."""
    # Double-buffered footprint = 2 buffers * (input tile + output tile).
    footprint_budget = min(_vmem_capacity_bytes() // 2, 32 * 1024 * 1024)
    bytes_per_row = 2 * _LANES * (in_itemsize + out_itemsize)
    block_rows = footprint_budget // bytes_per_row
    block_rows = min(block_rows, _MAX_BLOCK_ROWS)
    if max_block_rows is not None:
        block_rows = min(block_rows, max_block_rows)
    block_rows = max(8, (block_rows // 8) * 8)       # sublane-aligned tile
    if block_rows >= rows:
        block_rows = rows                            # full-extent block (always legal)
    footprint = 2 * block_rows * _LANES * (in_itemsize + out_itemsize)
    vmem_limit = min(_vmem_capacity_bytes(),
                     max(16 * 1024 * 1024, int(footprint * 1.25) + (1 << 20)))
    return block_rows, vmem_limit


def _run_slab_kernel(x2d, w2, b2, out_dtype, block_rows, vmem_limit, alias_x):
    rows = x2d.shape[0]
    grid = (pl.cdiv(rows, block_rows),)   # last block may be ragged; Pallas masks it
    kwargs = {}
    if alias_x:
        kwargs["input_output_aliases"] = {2: 0}
    return pl.pallas_call(
        _linreg_kernel,
        out_shape=jax.ShapeDtypeStruct((rows, _LANES), out_dtype),
        grid=grid,
        in_specs=[
            pl.BlockSpec(memory_space=pltpu.MemorySpace.SMEM),     # weights (1,1)
            pl.BlockSpec(memory_space=pltpu.MemorySpace.SMEM),     # bias    (1,1)
            pl.BlockSpec((block_rows, _LANES), lambda i: (i, 0)),  # x tile
        ],
        out_specs=pl.BlockSpec((block_rows, _LANES), lambda i: (i, 0)),
        compiler_params=pltpu.CompilerParams(
            dimension_semantics=("parallel",),   # megacore-friendly on v7x
            vmem_limit_bytes=vmem_limit,
        ),
        **kwargs,
    )(w2, b2, x2d)


def linear_regression_forward(x: jax.Array, weights: jax.Array, bias: jax.Array,
                              *, donate_x: bool = False, _max_block_rows=None) -> jax.Array:
    """y = weights * x + bias for any input shape; weights/bias are shape-(1,) f32 params."""
    orig_shape = x.shape
    w = jnp.asarray(weights, jnp.float32)
    b = jnp.asarray(bias, jnp.float32)
    # PyTorch type promotion: f32 param * x  (e.g. bf16 input -> f32 output).
    out_dtype = jnp.result_type(x.dtype, jnp.float32)
    total = x.size

    # --- small-input fast path: launch/repack overhead would dominate ---
    if total < _SMALL_TOTAL:
        return (w * x + b).astype(out_dtype)

    w2 = w.reshape(1, 1)
    b2 = b.reshape(1, 1)
    in_itemsize = jnp.dtype(x.dtype).itemsize
    out_itemsize = jnp.dtype(out_dtype).itemsize

    if total % _LANES == 0:
        # --- aligned zero-copy path: free reshapes in and out, kernel is the only HBM traffic ---
        rows = total // _LANES
        block_rows, vmem_limit = _pick_block_rows(rows, in_itemsize, out_itemsize,
                                                  _max_block_rows)
        x2d = x.reshape(rows, _LANES)
        alias = bool(donate_x) and (x.dtype == out_dtype)
        y2d = _run_slab_kernel(x2d, w2, b2, out_dtype, block_rows, vmem_limit, alias)
        return y2d.reshape(orig_shape)

    # --- unaligned path: pad only the tail (<1024 elems) to the next 1024 multiple ---
    rows = pl.cdiv(total, _LANES)
    padded_total = rows * _LANES
    block_rows, vmem_limit = _pick_block_rows(rows, in_itemsize, out_itemsize,
                                              _max_block_rows)
    flat = jnp.pad(x.reshape(-1), (0, padded_total - total))
    x2d = flat.reshape(rows, _LANES)
    y2d = _run_slab_kernel(x2d, w2, b2, out_dtype, block_rows, vmem_limit, False)
    return y2d.reshape(-1)[:total].reshape(orig_shape)


if __name__ == "__main__":
    key = jax.random.PRNGKey(0)
    kw, kb, k1, k2, k3, k4, k5 = jax.random.split(key, 7)

    # Deterministic "randn"-style parameter init (module __init__: torch.randn(1) each).
    weights = jax.random.normal(kw, (1,), dtype=jnp.float32)
    bias = jax.random.normal(kb, (1,), dtype=jnp.float32)

    def ref(x):
        return weights * x + bias

    # 1) Tutorial-sized inputs -> small-input fast path (plain JAX).
    x_small = jax.random.normal(k1, (8, 1), dtype=jnp.float32)
    y_small = jax.block_until_ready(linear_regression_forward(x_small, weights, bias))
    assert y_small.shape == x_small.shape
    assert jnp.allclose(y_small, ref(x_small), atol=1e-6, rtol=1e-6)

    x_3d = jax.random.normal(k2, (2, 3, 5), dtype=jnp.float32)
    y_3d = jax.block_until_ready(linear_regression_forward(x_3d, weights, bias))
    assert y_3d.shape == x_3d.shape
    assert jnp.allclose(y_3d, ref(x_3d), atol=1e-6, rtol=1e-6)

    # Dtype-promotion check (bf16 input * f32 params -> f32, like PyTorch).
    x_bf16 = jax.random.normal(k3, (4, 7), dtype=jnp.bfloat16)
    y_bf16 = jax.block_until_ready(linear_regression_forward(x_bf16, weights, bias))
    assert y_bf16.dtype == jnp.float32
    assert jnp.allclose(y_bf16, ref(x_bf16), atol=1e-2, rtol=1e-2)

    # 2) Aligned (total % 1024 == 0) -> zero-copy Pallas slab path.
    #    Small _max_block_rows forces a multi-block grid with a ragged (masked) last block.
    x_al = jax.random.normal(k4, (200, 1024), dtype=jnp.float32)
    y_al = jax.block_until_ready(
        linear_regression_forward(x_al, weights, bias, _max_block_rows=64))
    assert y_al.shape == x_al.shape and y_al.dtype == jnp.float32
    assert jnp.allclose(y_al, ref(x_al), atol=1e-6, rtol=1e-6)

    # Same input with default (full-extent) tiling.
    y_al2 = jax.block_until_ready(linear_regression_forward(x_al, weights, bias))
    assert jnp.allclose(y_al2, ref(x_al), atol=1e-6, rtol=1e-6)

    # 3) Unaligned (total % 1024 != 0) -> tail-padded slab path, ragged last block.
    x_un = jax.random.normal(k5, (150, 700), dtype=jnp.float32)
    y_un = jax.block_until_ready(
        linear_regression_forward(x_un, weights, bias, _max_block_rows=32))
    assert y_un.shape == x_un.shape
    assert jnp.allclose(y_un, ref(x_un), atol=1e-6, rtol=1e-6)

    print("KERNEL_OK")
</pallas_src>

<mosaic_0001>
module attributes {stable_mosaic.version = 11 : i64} {
  func.func @_linreg_kernel(%arg0: i32, %arg1: memref<1x1xf32, #tpu.memory_space<smem>>, %arg2: memref<1x1xf32, #tpu.memory_space<smem>>, %arg3: memref<64x1024xf32, #tpu.memory_space<vmem>>, %arg4: memref<64x1024xf32, #tpu.memory_space<vmem>>) attributes {dimension_semantics = [#tpu.dimension_semantics<parallel>], iteration_bounds = array<i64: 4>, scalar_prefetch = 0 : i64, scratch_operands = 0 : i64, tpu.core_type = #tpu.core_type<tc>, window_params = [{transform_indices = @transform_0, window_bounds = array<i64: 1, 1>}, {transform_indices = @transform_1, window_bounds = array<i64: 1, 1>}, {transform_indices = @transform_2, window_bounds = array<i64: 64, 1024>}, {transform_indices = @transform_3, window_bounds = array<i64: 64, 1024>}]} {
    %c0 = arith.constant 0 : index
    %c0_0 = arith.constant 0 : index
    %0 = memref.load %arg1[%c0, %c0_0] : memref<1x1xf32, #tpu.memory_space<smem>>
    %c0_1 = arith.constant 0 : index
    %c0_2 = arith.constant 0 : index
    %1 = memref.load %arg2[%c0_1, %c0_2] : memref<1x1xf32, #tpu.memory_space<smem>>
    %c0_3 = arith.constant 0 : index
    %c0_4 = arith.constant 0 : index
    %2 = vector.load %arg3[%c0_3, %c0_4] : memref<64x1024xf32, #tpu.memory_space<vmem>>, vector<64x1024xf32>
    %3 = vector.broadcast %0 : f32 to vector<64x1024xf32>
    %4 = arith.mulf %2, %3 : vector<64x1024xf32>
    %5 = vector.broadcast %1 : f32 to vector<64x1024xf32>
    %6 = arith.addf %4, %5 : vector<64x1024xf32>
    %c0_5 = arith.constant 0 : index
    %c0_6 = arith.constant 0 : index
    %7 = vector.load %arg4[%c0_5, %c0_6] : memref<64x1024xf32, #tpu.memory_space<vmem>>, vector<64x1024xf32>
    tpu.vector_store %arg4[%c0_5, %c0_6], %6 {strides = array<i32>} : memref<64x1024xf32, #tpu.memory_space<vmem>>, vector<64x1024xf32>,
    return
  }
  func.func @transform_0(%arg0: i32) -> (i32, i32) {
    %c0_i32 = arith.constant 0 : i32
    %c0_i32_0 = arith.constant 0 : i32
    %c0_i32_1 = arith.constant 0 : i32
    return %c0_i32, %c0_i32_0 : i32, i32
  }
  func.func @transform_1(%arg0: i32) -> (i32, i32) {
    %c0_i32 = arith.constant 0 : i32
    %c0_i32_0 = arith.constant 0 : i32
    %c0_i32_1 = arith.constant 0 : i32
    return %c0_i32, %c0_i32_0 : i32, i32
  }
  func.func @transform_2(%arg0: i32) -> (i32, i32) {
    %c0_i32 = arith.constant 0 : i32
    %c0_i32_0 = arith.constant 0 : i32
    return %arg0, %c0_i32 : i32, i32
  }
  func.func @transform_3(%arg0: i32) -> (i32, i32) {
    %c0_i32 = arith.constant 0 : i32
    %c0_i32_0 = arith.constant 0 : i32
    return %arg0, %c0_i32 : i32, i32
  }
}

</mosaic_0001>

<llo_original>
// kernel: tpu_custom_call.1
$region0: #{tpu_custom_call.1}
  #allocation0 [shape = 'u32[]', space=smem, size = 0x4, offset = 0x4, fixed_abs, tag = 'smem constant byte address 0x4 - core index']
  #allocation1 [shape = 'u32[144,128]{1,0:T(1,128)}', space=vmem, size = 0x12000, scoped, tag = 'internal scratch']
  #allocation2 [shape = 'f32[1,1]{1,0:T(1,128)S(6)}', space=smem, size = 0x200, scoped, tag = 'scoped memory for tpu_custom_call.1']
  #allocation3 [shape = 'f32[1,1]{1,0:T(1,128)S(6)}', space=smem, size = 0x200, scoped, tag = 'scoped memory for tpu_custom_call.1']
  %s0 = inlined_call_operand.<no memory space> [shape: f32[1,1], index: 0, kind: input, shape index: {}]
  %s1 = inlined_call_operand.<no memory space> [shape: f32[1,1], index: 1, kind: input, shape index: {}]
  %s2 = inlined_call_operand.hbm [shape: f32[200,1024], index: 2, kind: input, shape index: {}]
  %s3 = inlined_call_operand.hbm [shape: f32[200,1024], index: 3, kind: output, shape index: {}]
  %s4 = sld [smem:[#allocation0]]
  $region49: #{tpu_custom_call.1} parent=0
    _
  %s6 = ssub.s32 1, %s4
  %s7 = scalar_select 0, %s6, %s4
  %8 = sst [smem:[#allocation2]] %s0
  %9 = sst [smem:[#allocation3]] %s1
  $region1: #{tpu_custom_call.1} parent=0
    #allocation4 [shape = 'u8[524288]{0}', space=vmem, size = 0x80000, scoped, tag = 'input window, operand 2']
    #allocation5 [shape = 's32[2]{0}', space=sflag, size = 0x8, scoped, tag = 'scoped memory for tpu_custom_call.1']
    #allocation6 [shape = 's32[2]{0}', space=sflag, size = 0x8, scoped, tag = 'scoped memory for tpu_custom_call.1']
    #allocation7 [shape = 'u8[524288]{0}', space=vmem, size = 0x80000, scoped, tag = 'output window, operand 0']
    %10 = vsyncpa [#allocation5], 0
    %s11 = scalar_lea.sflag [#allocation5], 1
    %12 = vsyncpa %s11, 0
    %13 = vsyncpa [#allocation6], 0
    %s14 = scalar_lea.sflag [#allocation6], 1
    %15 = vsyncpa %s14, 0
    loop: start=0, step=1, limit=6
    $region2: #{tpu_custom_call.1} parent=1 // loop_pre_header
      _
    $region3: #{tpu_custom_call.1} parent=1 // loop_header
      %s17 = sphi 0, %s21
      %p18 = scmp.ge.s32.totalorder %s17, 6
      %s25 = sphi 0, %s25
      %s27 = sphi 0, %s25
      %s28 = sphi 0, %s27
      %s42 = sphi 0, %s28
      %s46 = sphi 0, %s46
      %s48 = sphi 0, %s46
      %s49 = sphi 0, %s48
      %s63 = sphi 0, %s49
      %s69 = sphi 0, %s71
      %s72 = sphi 0, %s69
      %s73 = sphi 0, %s72
      %s89 = sphi 0, %s73
      %s95 = sphi 0, %s97
      %s98 = sphi 0, %s95
      %s99 = sphi 0, %s98
      %s115 = sphi 0, %s99
    $region4: #{tpu_custom_call.1} parent=1 // loop_header_branch
      %20 = sbr.rel (%p18) target = $region8
    $region5: #{tpu_custom_call.1} parent=1 // loop_body
      %s22 = ssub.s32 %s17, 1
      %s23 = ssub.s32 %s17, 2
      %s24 = sadd.s32 %s17, 1
      %s26 = sadd.s32 %s25, 1
      %p29 = scmp.eq.s32.totalorder %s17, 3
      %p30 = scmp.ne.s32.totalorder %s25, %s27
      %p31 = scmp.eq.s32.totalorder %s17, 0
      %p32 = por %p30, %p31
      %p33 = scmp.ne.s32.totalorder %s25, %s27
      %p34 = scmp.eq.s32.totalorder %s22, 3
      %p35 = por %p33, %p34
      %p36 = scmp.ne.s32.totalorder %s27, %s28
      %p37 = scmp.eq.s32.totalorder %s22, 0
      %p38 = por %p36, %p37
      %p39 = scmp.ne.s32.totalorder %s27, %s28
      %p40 = scmp.eq.s32.totalorder %s23, 3
      %p41 = por %p39, %p40
      %p43 = scmp.ne.s32.totalorder %s28, %s42
      %p44 = scmp.eq.s32.totalorder %s23, 0
      %p45 = por %p43, %p44
      %s47 = sadd.s32 %s46, 1
      %p50 = scmp.eq.s32.totalorder %s17, 3
      %p51 = scmp.ne.s32.totalorder %s46, %s48
      %p52 = scmp.eq.s32.totalorder %s17, 0
      %p53 = por %p51, %p52
      %p54 = scmp.ne.s32.totalorder %s46, %s48
      %p55 = scmp.eq.s32.totalorder %s22, 3
      %p56 = por %p54, %p55
      %p57 = scmp.ne.s32.totalorder %s48, %s49
      %p58 = scmp.eq.s32.totalorder %s22, 0
      %p59 = por %p57, %p58
      %p60 = scmp.ne.s32.totalorder %s48, %s49
      %p61 = scmp.eq.s32.totalorder %s23, 3
      %p62 = por %p60, %p61
      %p64 = scmp.ne.s32.totalorder %s49, %s63
      %p65 = scmp.eq.s32.totalorder %s23, 0
      %p66 = por %p64, %p65
      %s67 = ssub.s32 %s17, %s24
      %p68 = scmp.eq.s32.totalorder %s67, 0
      %s70 = sadd.s32 %s69, 1
      %s71 = scalar_select %p68, %s69, %s70
      %p74 = pneg %p68
      %p75 = scmp.eq.s32.totalorder %s17, 3
      %p76 = por %p74, %p75
      %p77 = scmp.ne.s32.totalorder %s69, %s72
      %p78 = scmp.eq.s32.totalorder %s17, 0
      %p79 = por %p77, %p78
      %p80 = scmp.ne.s32.totalorder %s69, %s72
      %p81 = scmp.eq.s32.totalorder %s22, 3
      %p82 = por %p80, %p81
      %p83 = scmp.ne.s32.totalorder %s72, %s73
      %p84 = scmp.eq.s32.totalorder %s22, 0
      %p85 = por %p83, %p84
      %p86 = scmp.ne.s32.totalorder %s72, %s73
      %p87 = scmp.eq.s32.totalorder %s23, 3
      %p88 = por %p86, %p87
      %p90 = scmp.ne.s32.totalorder %s73, %s89
      %p91 = scmp.eq.s32.totalorder %s23, 0
      %p92 = por %p90, %p91
      %s93 = ssub.s32 %s17, %s24
      %p94 = scmp.eq.s32.totalorder %s93, 0
      %s96 = sadd.s32 %s95, 1
      %s97 = scalar_select %p94, %s95, %s96
      %p100 = pneg %p94
      %p101 = scmp.eq.s32.totalorder %s17, 3
      %p102 = por %p100, %p101
      %p103 = scmp.ne.s32.totalorder %s95, %s98
      %p104 = scmp.eq.s32.totalorder %s17, 0
      %p105 = por %p103, %p104
      %p106 = scmp.ne.s32.totalorder %s95, %s98
      %p107 = scmp.eq.s32.totalorder %s22, 3
      %p108 = por %p106, %p107
      %p109 = scmp.ne.s32.totalorder %s98, %s99
      %p110 = scmp.eq.s32.totalorder %s22, 0
      %p111 = por %p109, %p110
      %p112 = scmp.ne.s32.totalorder %s98, %s99
      %p113 = scmp.eq.s32.totalorder %s23, 3
      %p114 = por %p112, %p113
      %p116 = scmp.ne.s32.totalorder %s99, %s115
      %p117 = scmp.eq.s32.totalorder %s23, 0
      %p118 = por %p116, %p117
      %p119 = scmp.le.s32.totalorder 1, %s17
      %p120 = scmp.lt.s32.totalorder %s17, 5
      %p121 = pnand %p119, %p120
      %p122 = pneg %p121
      // Predicated region
      $region9: #{tpu_custom_call.1} parent=5 // pred_check
        _
      $region10: #{tpu_custom_call.1} parent=5 // pred_check_branch
        %124 = sbr.rel (%p121) target = $region12
      $region11: #{tpu_custom_call.1} parent=5 // pred_region
        %s125 = ssub.s32 %s17, 1
        // Predicated region
        $region13: #{tpu_custom_call.1} parent=11 // pred_check
          %p126 = pneg %p38
        $region14: #{tpu_custom_call.1} parent=11 // pred_check_branch
          %128 = sbr.rel (%p126) target = $region16
        $region15: #{tpu_custom_call.1} parent=11 // pred_region
          _
        $region16: #{tpu_custom_call.1} parent=11 // pred_fallthru
          _
        // Predicated region
        $region17: #{tpu_custom_call.1} parent=11 // pred_check
          %p129 = pneg %p59
        $region18: #{tpu_custom_call.1} parent=11 // pred_check_branch
          %131 = sbr.rel (%p129) target = $region20
        $region19: #{tpu_custom_call.1} parent=11 // pred_region
          _
        $region20: #{tpu_custom_call.1} parent=11 // pred_fallthru
          _
      $region12: #{tpu_custom_call.1} parent=5 // pred_fallthru
        _
      %p132 = scmp.lt.s32.totalorder %s17, 4
      // Predicated region
      $region21: #{tpu_custom_call.1} parent=5 // pred_check
        %p133 = pneg %p132
      $region22: #{tpu_custom_call.1} parent=5 // pred_check_branch
        %135 = sbr.rel (%p133) target = $region24
      $region23: #{tpu_custom_call.1} parent=5 // pred_region
        // Predicated region
        $region25: #{tpu_custom_call.1} parent=23 // pred_check
          %p136 = pneg %p79
        $region26: #{tpu_custom_call.1} parent=23 // pred_check_branch
          %138 = sbr.rel (%p136) target = $region28
        $region27: #{tpu_custom_call.1} parent=23 // pred_region
          %s139 = sand.u32 %s69, 1
          %s140 = scalar_lea.sflag [#allocation5], %s139
          %s141 = sand.u32 %s69, 1
          %s142 = smul.addr %s141, 512
          %s143 = scalar_lea.vmem [#allocation4], %s142
          %s144 = smul.u32 8, %s17
          %s145 = ssub.s32 25, %s144
          %p146 = scmp.lt.s32.totalorder %s145, 8
          %s147 = scalar_select %p146, %s145, 8
          %s148 = smul.u32 128, %s147
          %s149 = smul.u32 %s148, 8
          %s151 = ssub.s32 8192, %s149
          %152 = vsyncadd %s140, %s151
          %p153 = scmp.ne.s32.totalorder 0, %s149
          %s154 = smul.addr %s144, 8
          %s155 = smul.addr %s154, 128
          %s156 = scalar_lea.hbm %s2, %s155
          %s157 = smul.u32 64, %s147
          %s158 = sshll.u32 %s143, 4
          %s159 = int_to_ptr.vmem [resolvable:$true] %s158
          %s160 = sshll.u32 %s157, 4
          %164 = dma.hbm_to_vmem [thread:$0]  (%p153), %s156, %s160, %s159, %s140, 1024, 1024, 64
        $region28: #{tpu_custom_call.1} parent=23 // pred_fallthru
          _
      $region24: #{tpu_custom_call.1} parent=5 // pred_fallthru
        _
      %p165 = scmp.le.s32.totalorder 1, %s17
      %p166 = scmp.lt.s32.totalorder %s17, 5
      %p167 = pnand %p165, %p166
      %p168 = pneg %p167
      // Predicated region
      $region29: #{tpu_custom_call.1} parent=5 // pred_check
        _
      $region30: #{tpu_custom_call.1} parent=5 // pred_check_branch
        %170 = sbr.rel (%p167) target = $region32
      $region31: #{tpu_custom_call.1} parent=5 // pred_region
        %s171 = ssub.s32 %s17, 1
        %s172 = sand.u32 %s72, 1
        %s173 = scalar_lea.sflag [#allocation5], %s172
        %s174 = sand.u32 %s72, 1
        %s175 = smul.addr %s174, 512
        %s176 = scalar_lea.vmem [#allocation4], %s175
        // Predicated region
        $region33: #{tpu_custom_call.1} parent=31 // pred_check
          %p177 = pneg %p85
        $region34: #{tpu_custom_call.1} parent=31 // pred_check_branch
          %179 = sbr.rel (%p177) target = $region36
        $region35: #{tpu_custom_call.1} parent=31 // pred_region
          %180 = dma.done %s173, 8192
        $region36: #{tpu_custom_call.1} parent=31 // pred_fallthru
          _
        %p181 = pneg %p38
        %p182 = pneg %p35
        %p183 = pneg %p59
        %p184 = pneg %p56
        %s185 = sand.u32 %s72, 1
        %s186 = scalar_lea.sflag [#allocation5], %s185
        %s187 = sand.u32 %s72, 1
        %s188 = smul.addr %s187, 512
        %s189 = scalar_lea.vmem [#allocation4], %s188
        %p190 = pneg %p85
        %p191 = pneg %p82
        %p192 = pneg %p111
        %p193 = pneg %p108
        %s194 = sand.u32 %s98, 1
        %s195 = scalar_lea.sflag [#allocation6], %s194
        %s196 = sand.u32 %s98, 1
        %s197 = smul.addr %s196, 512
        %s198 = scalar_lea.vmem [#allocation7], %s197
        %s199 = smul.u32 8, %s22
        %s200 = ssub.s32 25, %s199
        %p201 = scmp.lt.s32.totalorder %s200, 8
        %s202 = scalar_select %p201, %s200, 8
        %s203 = smul.u32 128, %s202
        %s204 = smul.u32 %s203, 8
        %s205 = smul.u32 8, %s22
        %s206 = ssub.s32 25, %s205
        %p207 = scmp.lt.s32.totalorder %s206, 8
        %s208 = scalar_select %p207, %s206, 8
        %s209 = smul.u32 128, %s208
        %s210 = smul.u32 %s209, 8
        %s211 = sld [smem:[#allocation2]]
        %s212 = sld [smem:[#allocation3]]
        %v213 = vld [vmem:[%s176] sm:$0xff]
        %v214 = vld [vmem:[%s176 + $0x8] sm:$0xff]
        %v215 = vld [vmem:[%s176 + $0x10] sm:$0xff]
        %v216 = vld [vmem:[%s176 + $0x18] sm:$0xff]
        %v217 = vld [vmem:[%s176 + $0x20] sm:$0xff]
        %v218 = vld [vmem:[%s176 + $0x28] sm:$0xff]
        %v219 = vld [vmem:[%s176 + $0x30] sm:$0xff]
        %v220 = vld [vmem:[%s176 + $0x38] sm:$0xff]
        %v221 = vld [vmem:[%s176 + $0x40] sm:$0xff]
        %v222 = vld [vmem:[%s176 + $0x48] sm:$0xff]
        %v223 = vld [vmem:[%s176 + $0x50] sm:$0xff]
        %v224 = vld [vmem:[%s176 + $0x58] sm:$0xff]
        %v225 = vld [vmem:[%s176 + $0x60] sm:$0xff]
        %v226 = vld [vmem:[%s176 + $0x68] sm:$0xff]
        %v227 = vld [vmem:[%s176 + $0x70] sm:$0xff]
        %v228 = vld [vmem:[%s176 + $0x78] sm:$0xff]
        %v229 = vld [vmem:[%s176 + $0x80] sm:$0xff]
        %v230 = vld [vmem:[%s176 + $0x88] sm:$0xff]
        %v231 = vld [vmem:[%s176 + $0x90] sm:$0xff]
        %v232 = vld [vmem:[%s176 + $0x98] sm:$0xff]
        %v233 = vld [vmem:[%s176 + $0xa0] sm:$0xff]
        %v234 = vld [vmem:[%s176 + $0xa8] sm:$0xff]
        %v235 = vld [vmem:[%s176 + $0xb0] sm:$0xff]
        %v236 = vld [vmem:[%s176 + $0xb8] sm:$0xff]
        %v237 = vld [vmem:[%s176 + $0xc0] sm:$0xff]
        %v238 = vld [vmem:[%s176 + $0xc8] sm:$0xff]
        %v239 = vld [vmem:[%s176 + $0xd0] sm:$0xff]
        %v240 = vld [vmem:[%s176 + $0xd8] sm:$0xff]
        %v241 = vld [vmem:[%s176 + $0xe0] sm:$0xff]
        %v242 = vld [vmem:[%s176 + $0xe8] sm:$0xff]
        %v243 = vld [vmem:[%s176 + $0xf0] sm:$0xff]
        %v244 = vld [vmem:[%s176 + $0xf8] sm:$0xff]
        %v245 = vld [vmem:[%s176 + $0x100] sm:$0xff]
        %v246 = vld [vmem:[%s176 + $0x108] sm:$0xff]
        %v247 = vld [vmem:[%s176 + $0x110] sm:$0xff]
        %v248 = vld [vmem:[%s176 + $0x118] sm:$0xff]
        %v249 = vld [vmem:[%s176 + $0x120] sm:$0xff]
        %v250 = vld [vmem:[%s176 + $0x128] sm:$0xff]
        %v251 = vld [vmem:[%s176 + $0x130] sm:$0xff]
        %v252 = vld [vmem:[%s176 + $0x138] sm:$0xff]
        %v253 = vld [vmem:[%s176 + $0x140] sm:$0xff]
        %v254 = vld [vmem:[%s176 + $0x148] sm:$0xff]
        %v255 = vld [vmem:[%s176 + $0x150] sm:$0xff]
        %v256 = vld [vmem:[%s176 + $0x158] sm:$0xff]
        %v257 = vld [vmem:[%s176 + $0x160] sm:$0xff]
        %v258 = vld [vmem:[%s176 + $0x168] sm:$0xff]
        %v259 = vld [vmem:[%s176 + $0x170] sm:$0xff]
        %v260 = vld [vmem:[%s176 + $0x178] sm:$0xff]
        %v261 = vld [vmem:[%s176 + $0x180] sm:$0xff]
        %v262 = vld [vmem:[%s176 + $0x188] sm:$0xff]
        %v263 = vld [vmem:[%s176 + $0x190] sm:$0xff]
        %v264 = vld [vmem:[%s176 + $0x198] sm:$0xff]
        %v265 = vld [vmem:[%s176 + $0x1a0] sm:$0xff]
        %v266 = vld [vmem:[%s176 + $0x1a8] sm:$0xff]
        %v267 = vld [vmem:[%s176 + $0x1b0] sm:$0xff]
        %v268 = vld [vmem:[%s176 + $0x1b8] sm:$0xff]
        %v269 = vld [vmem:[%s176 + $0x1c0] sm:$0xff]
        %v270 = vld [vmem:[%s176 + $0x1c8] sm:$0xff]
        %v271 = vld [vmem:[%s176 + $0x1d0] sm:$0xff]
        %v272 = vld [vmem:[%s176 + $0x1d8] sm:$0xff]
        %v273 = vld [vmem:[%s176 + $0x1e0] sm:$0xff]
        %v274 = vld [vmem:[%s176 + $0x1e8] sm:$0xff]
        %v275 = vld [vmem:[%s176 + $0x1f0] sm:$0xff]
        %v276 = vld [vmem:[%s176 + $0x1f8] sm:$0xff]
        %v277 = vstv %s211
        %v278 = vmul.f32 %v213, %v277
        %v279 = vmul.f32 %v214, %v277
        %v280 = vmul.f32 %v215, %v277
        %v281 = vmul.f32 %v216, %v277
        %v282 = vmul.f32 %v217, %v277
        %v283 = vmul.f32 %v218, %v277
        %v284 = vmul.f32 %v219, %v277
        %v285 = vmul.f32 %v220, %v277
        %v286 = vmul.f32 %v221, %v277
        %v287 = vmul.f32 %v222, %v277
        %v288 = vmul.f32 %v223, %v277
        %v289 = vmul.f32 %v224, %v277
        %v290 = vmul.f32 %v225, %v277
        %v291 = vmul.f32 %v226, %v277
        %v292 = vmul.f32 %v227, %v277
        %v293 = vmul.f32 %v228, %v277
        %v294 = vmul.f32 %v229, %v277
        %v295 = vmul.f32 %v230, %v277
        %v296 = vmul.f32 %v231, %v277
        %v297 = vmul.f32 %v232, %v277
        %v298 = vmul.f32 %v233, %v277
        %v299 = vmul.f32 %v234, %v277
        %v300 = vmul.f32 %v235, %v277
        %v301 = vmul.f32 %v236, %v277
        %v302 = vmul.f32 %v237, %v277
        %v303 = vmul.f32 %v238, %v277
        %v304 = vmul.f32 %v239, %v277
        %v305 = vmul.f32 %v240, %v277
        %v306 = vmul.f32 %v241, %v277
        %v307 = vmul.f32 %v242, %v277
        %v308 = vmul.f32 %v243, %v277
        %v309 = vmul.f32 %v244, %v277
        %v310 = vmul.f32 %v245, %v277
        %v311 = vmul.f32 %v246, %v277
        %v312 = vmul.f32 %v247, %v277
        %v313 = vmul.f32 %v248, %v277
        %v314 = vmul.f32 %v249, %v277
        %v315 = vmul.f32 %v250, %v277
        %v316 = vmul.f32 %v251, %v277
        %v317 = vmul.f32 %v252, %v277
        %v318 = vmul.f32 %v253, %v277
        %v319 = vmul.f32 %v254, %v277
        %v320 = vmul.f32 %v255, %v277
        %v321 = vmul.f32 %v256, %v277
        %v322 = vmul.f32 %v257, %v277
        %v323 = vmul.f32 %v258, %v277
        %v324 = vmul.f32 %v259, %v277
        %v325 = vmul.f32 %v260, %v277
        %v326 = vmul.f32 %v261, %v277
        %v327 = vmul.f32 %v262, %v277
        %v328 = vmul.f32 %v263, %v277
        %v329 = vmul.f32 %v264, %v277
        %v330 = vmul.f32 %v265, %v277
        %v331 = vmul.f32 %v266, %v277
        %v332 = vmul.f32 %v267, %v277
        %v333 = vmul.f32 %v268, %v277
        %v334 = vmul.f32 %v269, %v277
        %v335 = vmul.f32 %v270, %v277
        %v336 = vmul.f32 %v271, %v277
        %v337 = vmul.f32 %v272, %v277
        %v338 = vmul.f32 %v273, %v277
        %v339 = vmul.f32 %v274, %v277
        %v340 = vmul.f32 %v275, %v277
        %v341 = vmul.f32 %v276, %v277
        %v342 = vstv %s212
        %v343 = vadd.f32 %v278, %v342
        %v344 = vadd.f32 %v279, %v342
        %v345 = vadd.f32 %v280, %v342
        %v346 = vadd.f32 %v281, %v342
        %v347 = vadd.f32 %v282, %v342
        %v348 = vadd.f32 %v283, %v342
        %v349 = vadd.f32 %v284, %v342
        %v350 = vadd.f32 %v285, %v342
        %v351 = vadd.f32 %v286, %v342
        %v352 = vadd.f32 %v287, %v342
        %v353 = vadd.f32 %v288, %v342
        %v354 = vadd.f32 %v289, %v342
        %v355 = vadd.f32 %v290, %v342
        %v356 = vadd.f32 %v291, %v342
        %v357 = vadd.f32 %v292, %v342
        %v358 = vadd.f32 %v293, %v342
        %v359 = vadd.f32 %v294, %v342
        %v360 = vadd.f32 %v295, %v342
        %v361 = vadd.f32 %v296, %v342
        %v362 = vadd.f32 %v297, %v342
        %v363 = vadd.f32 %v298, %v342
        %v364 = vadd.f32 %v299, %v342
        %v365 = vadd.f32 %v300, %v342
        %v366 = vadd.f32 %v301, %v342
        %v367 = vadd.f32 %v302, %v342
        %v368 = vadd.f32 %v303, %v342
        %v369 = vadd.f32 %v304, %v342
        %v370 = vadd.f32 %v305, %v342
        %v371 = vadd.f32 %v306, %v342
        %v372 = vadd.f32 %v307, %v342
        %v373 = vadd.f32 %v308, %v342
        %v374 = vadd.f32 %v309, %v342
        %v375 = vadd.f32 %v310, %v342
        %v376 = vadd.f32 %v311, %v342
        %v377 = vadd.f32 %v312, %v342
        %v378 = vadd.f32 %v313, %v342
        %v379 = vadd.f32 %v314, %v342
        %v380 = vadd.f32 %v315, %v342
        %v381 = vadd.f32 %v316, %v342
        %v382 = vadd.f32 %v317, %v342
        %v383 = vadd.f32 %v318, %v342
        %v384 = vadd.f32 %v319, %v342
        %v385 = vadd.f32 %v320, %v342
        %v386 = vadd.f32 %v321, %v342
        %v387 = vadd.f32 %v322, %v342
        %v388 = vadd.f32 %v323, %v342
        %v389 = vadd.f32 %v324, %v342
        %v390 = vadd.f32 %v325, %v342
        %v391 = vadd.f32 %v326, %v342
        %v392 = vadd.f32 %v327, %v342
        %v393 = vadd.f32 %v328, %v342
        %v394 = vadd.f32 %v329, %v342
        %v395 = vadd.f32 %v330, %v342
        %v396 = vadd.f32 %v331, %v342
        %v397 = vadd.f32 %v332, %v342
        %v398 = vadd.f32 %v333, %v342
        %v399 = vadd.f32 %v334, %v342
        %v400 = vadd.f32 %v335, %v342
        %v401 = vadd.f32 %v336, %v342
        %v402 = vadd.f32 %v337, %v342
        %v403 = vadd.f32 %v338, %v342
        %v404 = vadd.f32 %v339, %v342
        %v405 = vadd.f32 %v340, %v342
        %v406 = vadd.f32 %v341, %v342
        %407 = vst [vmem:[%s198] sm:$0xff] %v343
        %408 = vst [vmem:[%s198 + $0x8] sm:$0xff] %v344
        %409 = vst [vmem:[%s198 + $0x10] sm:$0xff] %v345
        %410 = vst [vmem:[%s198 + $0x18] sm:$0xff] %v346
        %411 = vst [vmem:[%s198 + $0x20] sm:$0xff] %v347
        %412 = vst [vmem:[%s198 + $0x28] sm:$0xff] %v348
        %413 = vst [vmem:[%s198 + $0x30] sm:$0xff] %v349
        %414 = vst [vmem:[%s198 + $0x38] sm:$0xff] %v350
        %415 = vst [vmem:[%s198 + $0x40] sm:$0xff] %v351
        %416 = vst [vmem:[%s198 + $0x48] sm:$0xff] %v352
        %417 = vst [vmem:[%s198 + $0x50] sm:$0xff] %v353
        %418 = vst [vmem:[%s198 + $0x58] sm:$0xff] %v354
        %419 = vst [vmem:[%s198 + $0x60] sm:$0xff] %v355
        %420 = vst [vmem:[%s198 + $0x68] sm:$0xff] %v356
        %421 = vst [vmem:[%s198 + $0x70] sm:$0xff] %v357
        %422 = vst [vmem:[%s198 + $0x78] sm:$0xff] %v358
        %423 = vst [vmem:[%s198 + $0x80] sm:$0xff] %v359
        %424 = vst [vmem:[%s198 + $0x88] sm:$0xff] %v360
        %425 = vst [vmem:[%s198 + $0x90] sm:$0xff] %v361
        %426 = vst [vmem:[%s198 + $0x98] sm:$0xff] %v362
        %427 = vst [vmem:[%s198 + $0xa0] sm:$0xff] %v363
        %428 = vst [vmem:[%s198 + $0xa8] sm:$0xff] %v364
        %429 = vst [vmem:[%s198 + $0xb0] sm:$0xff] %v365
        %430 = vst [vmem:[%s198 + $0xb8] sm:$0xff] %v366
        %431 = vst [vmem:[%s198 + $0xc0] sm:$0xff] %v367
        %432 = vst [vmem:[%s198 + $0xc8] sm:$0xff] %v368
        %433 = vst [vmem:[%s198 + $0xd0] sm:$0xff] %v369
        %434 = vst [vmem:[%s198 + $0xd8] sm:$0xff] %v370
        %435 = vst [vmem:[%s198 + $0xe0] sm:$0xff] %v371
        %436 = vst [vmem:[%s198 + $0xe8] sm:$0xff] %v372
        %437 = vst [vmem:[%s198 + $0xf0] sm:$0xff] %v373
        %438 = vst [vmem:[%s198 + $0xf8] sm:$0xff] %v374
        %439 = vst [vmem:[%s198 + $0x100] sm:$0xff] %v375
        %440 = vst [vmem:[%s198 + $0x108] sm:$0xff] %v376
        %441 = vst [vmem:[%s198 + $0x110] sm:$0xff] %v377
        %442 = vst [vmem:[%s198 + $0x118] sm:$0xff] %v378
        %443 = vst [vmem:[%s198 + $0x120] sm:$0xff] %v379
        %444 = vst [vmem:[%s198 + $0x128] sm:$0xff] %v380
        %445 = vst [vmem:[%s198 + $0x130] sm:$0xff] %v381
        %446 = vst [vmem:[%s198 + $0x138] sm:$0xff] %v382
        %447 = vst [vmem:[%s198 + $0x140] sm:$0xff] %v383
        %448 = vst [vmem:[%s198 + $0x148] sm:$0xff] %v384
        %449 = vst [vmem:[%s198 + $0x150] sm:$0xff] %v385
        %450 = vst [vmem:[%s198 + $0x158] sm:$0xff] %v386
        %451 = vst [vmem:[%s198 + $0x160] sm:$0xff] %v387
        %452 = vst [vmem:[%s198 + $0x168] sm:$0xff] %v388
        %453 = vst [vmem:[%s198 + $0x170] sm:$0xff] %v389
        %454 = vst [vmem:[%s198 + $0x178] sm:$0xff] %v390
        %455 = vst [vmem:[%s198 + $0x180] sm:$0xff] %v391
        %456 = vst [vmem:[%s198 + $0x188] sm:$0xff] %v392
        %457 = vst [vmem:[%s198 + $0x190] sm:$0xff] %v393
        %458 = vst [vmem:[%s198 + $0x198] sm:$0xff] %v394
        %459 = vst [vmem:[%s198 + $0x1a0] sm:$0xff] %v395
        %460 = vst [vmem:[%s198 + $0x1a8] sm:$0xff] %v396
        %461 = vst [vmem:[%s198 + $0x1b0] sm:$0xff] %v397
        %462 = vst [vmem:[%s198 + $0x1b8] sm:$0xff] %v398
        %463 = vst [vmem:[%s198 + $0x1c0] sm:$0xff] %v399
        %464 = vst [vmem:[%s198 + $0x1c8] sm:$0xff] %v400
        %465 = vst [vmem:[%s198 + $0x1d0] sm:$0xff] %v401
        %466 = vst [vmem:[%s198 + $0x1d8] sm:$0xff] %v402
        %467 = vst [vmem:[%s198 + $0x1e0] sm:$0xff] %v403
        %468 = vst [vmem:[%s198 + $0x1e8] sm:$0xff] %v404
        %469 = vst [vmem:[%s198 + $0x1f0] sm:$0xff] %v405
        %470 = vst [vmem:[%s198 + $0x1f8] sm:$0xff] %v406
        %s471 = sand.u32 %s98, 1
        %s472 = scalar_lea.sflag [#allocation6], %s471
        %s473 = sand.u32 %s98, 1
        %s474 = smul.addr %s473, 512
        %s475 = scalar_lea.vmem [#allocation7], %s474
        // Predicated region
        $region37: #{tpu_custom_call.1} parent=31 // pred_check
          %p476 = pneg %p108
        $region38: #{tpu_custom_call.1} parent=31 // pred_check_branch
          %478 = sbr.rel (%p476) target = $region40
        $region39: #{tpu_custom_call.1} parent=31 // pred_region
          %s479 = smul.u32 8, %s22
          %s480 = ssub.s32 25, %s479
          %p481 = scmp.lt.s32.totalorder %s480, 8
          %s482 = scalar_select %p481, %s480, 8
          %s483 = smul.u32 128, %s482
          %s484 = smul.u32 %s483, 8
          %s486 = ssub.s32 8192, %s484
          %487 = vsyncadd %s472, %s486
          %p488 = scmp.ne.s32.totalorder 0, %s484
          %s489 = smul.addr %s479, 8
          %s490 = smul.addr %s489, 128
          %s491 = scalar_lea.hbm %s3, %s490
          %s492 = smul.u32 64, %s482
          %s493 = sshll.u32 %s475, 4
          %s494 = int_to_ptr.vmem [resolvable:$true] %s493
          %s495 = sshll.u32 %s492, 4
          %499 = dma.vmem_to_hbm [thread:$0]  (%p488), %s494, %s495, %s491, %s472, 1024, 1024, 64
        $region40: #{tpu_custom_call.1} parent=31 // pred_fallthru
          _
      $region32: #{tpu_custom_call.1} parent=5 // pred_fallthru
        _
      %p500 = scmp.le.s32.totalorder 2, %s17
      // Predicated region
      $region41: #{tpu_custom_call.1} parent=5 // pred_check
        %p501 = pneg %p500
      $region42: #{tpu_custom_call.1} parent=5 // pred_check_branch
        %503 = sbr.rel (%p501) target = $region44
      $region43: #{tpu_custom_call.1} parent=5 // pred_region
        %s504 = ssub.s32 %s17, 2
        // Predicated region
        $region45: #{tpu_custom_call.1} parent=43 // pred_check
          %p505 = pneg %p114
        $region46: #{tpu_custom_call.1} parent=43 // pred_check_branch
          %507 = sbr.rel (%p505) target = $region48
        $region47: #{tpu_custom_call.1} parent=43 // pred_region
          %s508 = sand.u32 %s99, 1
          %s509 = scalar_lea.sflag [#allocation6], %s508
          %s510 = sand.u32 %s99, 1
          %s511 = smul.addr %s510, 512
          %s512 = scalar_lea.vmem [#allocation7], %s511
          %513 = dma.done %s509, 8192
        $region48: #{tpu_custom_call.1} parent=43 // pred_fallthru
          _
      $region44: #{tpu_custom_call.1} parent=5 // pred_fallthru
        _
    $region6: #{tpu_custom_call.1} parent=1 // loop_footer
      %s21 = sadd.s32 1, %s17
    $region7: #{tpu_custom_call.1} parent=1 // loop_footer_branch
      %16 = sbr.rel target = $region3
    $region8: #{tpu_custom_call.1} parent=1 // loop_exit
      _
    %514 = vsyncpa [#allocation5], 1
    %s515 = scalar_lea.sflag [#allocation5], 1
    %516 = vsyncpa %s515, 1
    %517 = vsyncpa [#allocation6], 1
    %s518 = scalar_lea.sflag [#allocation6], 1
    %519 = vsyncpa %s518, 1

</llo_original>
